<compile_context>
chip_gen: v5e
topology: v5e:2x2
jax: 0.10.0
libtpu: 0.0.40
codegen_flags: <defaults>
</compile_context>

<pallas_src>
import jax
import jax.numpy as jnp
from jax.experimental import pallas as pl
from jax.experimental.pallas import tpu as pltpu


def _ceil_to(x: int, m: int) -> int:
    return (x + m - 1) // m * m


def _pick_tile(n: int, requested: int) -> int:
    """Multiple of 128, <= requested, and (when possible) leaving >= 2 row
    tiles so the 'parallel' grid axis can shard across TensorCores (v7x)."""
    n128 = _ceil_to(n, 128)
    t = max(128, min(requested, n128) // 128 * 128)
    if n128 >= 256 and _ceil_to(n, t) // t < 2:
        t = max(128, (n128 // 2) // 128 * 128)
    return t


def _pbnl_kernel(p_rows_ref, p_cols_ref, w_ref, m_ref, out_ref, acc_ref):
    """Grid point (i, j): row tile i x column tile j of the graph.

    Accumulates, per class k, the quadratic-form partial
        sum_{r in tile_i, c in tile_j} prob[r,k] * M_off[r,c] * prob[c,k]
    into acc_ref across j.  On the last column step it adds the folded
    diagonal term sum_{r in tile_i} w[r] * prob[r,k]^2 (w = d_p - 0.3*d_bar),
    reduces over classes and writes the per-row-tile scalar partial.
    """
    j = pl.program_id(1)

    @pl.when(j == 0)
    def _():
        acc_ref[...] = jnp.zeros_like(acc_ref)

    p_rows = p_rows_ref[...]                                        # (K, tm) f32
    # MXU: (K, tm) @ (tm, tn) -> (K, tn); f32 accumulation even if M is bf16.
    t = jnp.dot(p_rows.astype(m_ref.dtype), m_ref[...],
                preferred_element_type=jnp.float32)
    acc_ref[...] += jnp.sum(t * p_cols_ref[...], axis=1, keepdims=True)  # (K, 1)

    @pl.when(j == pl.num_programs(1) - 1)
    def _():
        w = w_ref[...]                                              # (1, tm)
        diag = jnp.sum(p_rows * p_rows * w, axis=1, keepdims=True)  # (K, 1)
        out_ref[...] = jnp.sum(acc_ref[...] + diag, keepdims=True)  # (1, 1)


class ProbBalancedNormalizedLoss:
    """JAX/Pallas mirror of the PyTorch module (dense adjacency parts).

    __init__ precomputes (like the PyTorch __init__) the streamed matrix
    M_off = A_n - A_p and the folded diagonal weights, padded once to a
    multiple of the tile size.
    """
    # TODO(synk): the *_power matrices (mat_power, D_bar_power) of the original
    # __init__ are never used by forward(), so they are not built here.

    def __init__(self, a_p, a_n, *, tile=1024, matrix_dtype=jnp.float32,
                 eps=1e-6):
        n = a_p.shape[0]
        assert a_p.shape == (n, n) and a_n.shape == (n, n)
        self.n = n
        self.eps = float(eps)

        a_p = jnp.asarray(a_p, jnp.float32)
        a_n = jnp.asarray(a_n, jnp.float32)
        d_p = jnp.sum(a_p, axis=1)            # == A_p.transpose().sum(axis=0)
        d_n = jnp.sum(a_n, axis=1)

        self.tile = _pick_tile(n, tile)
        self.n_pad = _ceil_to(n, self.tile)
        self.pad = self.n_pad - n
        self.grid = self.n_pad // self.tile

        # Single streamed matrix; subtract in f32 BEFORE any bf16 cast.
        m_off = a_n - a_p
        w_row = (d_p - jnp.float32(0.3) * (d_p + d_n)).reshape(1, n)
        if self.pad:
            # Pad once at init (adjacency is static across forwards); padded
            # rows/cols are exact zeros, so zero-padded prob columns are inert.
            m_off = jnp.pad(m_off, ((0, self.pad), (0, self.pad)))
            w_row = jnp.pad(w_row, ((0, 0), (0, self.pad)))
        self.m_off = m_off.astype(matrix_dtype)
        self.w_row = w_row

        itemsize = jnp.dtype(matrix_dtype).itemsize
        m_bufs = 2 * self.tile * self.tile * itemsize   # double-buffered M_off
        # Enough for the streamed-matrix double buffer + prob blocks/scratch,
        # capped to leave compiler headroom on v7x's 64 MiB VMEM.
        self._vmem_limit = int(min(max(32 << 20, m_bufs + (16 << 20)), 48 << 20))

    def __call__(self, prob):
        n, k = prob.shape
        assert n == self.n
        tile, g = self.tile, self.grid

        prob_t = jnp.asarray(prob, jnp.float32).T            # (K, N) lane-dense
        if self.pad:
            prob_t = jnp.pad(prob_t, ((0, 0), (0, self.pad)))

        partials = pl.pallas_call(
            _pbnl_kernel,
            out_shape=jax.ShapeDtypeStruct((g, 1, 1), jnp.float32),
            grid_spec=pltpu.PrefetchScalarGridSpec(
                num_scalar_prefetch=0,
                grid=(g, g),
                in_specs=[
                    pl.BlockSpec((k, tile), lambda i, j: (0, i)),     # prob rows
                    pl.BlockSpec((k, tile), lambda i, j: (0, j)),     # prob cols
                    pl.BlockSpec((1, tile), lambda i, j: (0, i)),     # diag weights
                    pl.BlockSpec((tile, tile), lambda i, j: (i, j)),  # M_off tile
                ],
                out_specs=pl.BlockSpec((None, 1, 1), lambda i, j: (i, 0, 0)),
                scratch_shapes=[pltpu.VMEM((k, 1), jnp.float32)],
            ),
            compiler_params=pltpu.CompilerParams(
                dimension_semantics=("parallel", "arbitrary"),
                vmem_limit_bytes=self._vmem_limit,
            ),
        )(prob_t, prob_t, self.w_row, self.m_off)

        # Tiny scalar epilogue: per-class epsilon terms of the denominators
        # and the final normalization by the (unpadded) node count.
        total = (jnp.sum(partials)
                 - jnp.float32(0.3) * jnp.float32(self.eps) * jnp.float32(k))
        return (total / jnp.float32(n)).reshape((1,))


def _reference_loss(prob, a_p, a_n):
    # Plain-JAX mirror of the PyTorch forward, for verification.
    n, k = prob.shape
    eps = jnp.float32(1e-6)
    d_p = jnp.sum(a_p, axis=1)
    d_n = jnp.sum(a_n, axis=1)
    mat = jnp.diag(d_p) - a_p + a_n          # D_p - A_p + A_n
    d_bar = jnp.diag(d_p + d_n)              # D_p + D_n
    result = jnp.zeros((), jnp.float32)
    for c in range(k):
        p = prob[:, c:c + 1]
        den = (p.T @ (d_bar @ p))[0, 0] + eps
        num = (p.T @ (mat @ p))[0, 0]
        result = result + (num - jnp.float32(0.3) * den)
    return (result / n).reshape((1,))


if __name__ == "__main__":
    key = jax.random.PRNGKey(0)
    num_nodes, num_classes = 200, 8   # small graph: tile auto-shrinks to 128 -> 2x2 grid

    k1, k2, k3 = jax.random.split(key, 3)
    a_p = jax.random.uniform(k1, (num_nodes, num_nodes), dtype=jnp.float32)
    a_n = jax.random.uniform(k2, (num_nodes, num_nodes), dtype=jnp.float32)
    logits = jax.random.normal(k3, (num_nodes, num_classes), dtype=jnp.float32)
    prob = jax.nn.softmax(logits, axis=-1)

    loss_mod = ProbBalancedNormalizedLoss(a_p, a_n)   # f32 path for tight check
    loss = loss_mod(prob)
    jax.block_until_ready(loss)

    ref = _reference_loss(prob, a_p, a_n)
    assert loss.shape == (1,)
    assert jnp.allclose(loss, ref, rtol=1e-3, atol=1e-3), (loss, ref)
    print("KERNEL_OK")
</pallas_src>

<mosaic_0001>
module attributes {stable_mosaic.version = 11 : i64} {
  func.func @_pbnl_kernel(%arg0: i32, %arg1: i32, %arg2: memref<8x128xf32, #tpu.memory_space<vmem>>, %arg3: memref<8x128xf32, #tpu.memory_space<vmem>>, %arg4: memref<1x128xf32, #tpu.memory_space<vmem>>, %arg5: memref<128x128xf32, #tpu.memory_space<vmem>>, %arg6: memref<1x1x1xf32, #tpu.memory_space<vmem>>, %arg7: memref<8x1xf32, #tpu.memory_space<vmem>>) attributes {dimension_semantics = [#tpu.dimension_semantics<parallel>, #tpu.dimension_semantics<arbitrary>], iteration_bounds = array<i64: 2, 2>, scalar_prefetch = 0 : i64, scratch_operands = 1 : i64, tpu.core_type = #tpu.core_type<tc>, window_params = [{transform_indices = @transform_0, window_bounds = array<i64: 8, 128>}, {transform_indices = @transform_1, window_bounds = array<i64: 8, 128>}, {transform_indices = @transform_2, window_bounds = array<i64: 1, 128>}, {transform_indices = @transform_3, window_bounds = array<i64: 128, 128>}, {transform_indices = @transform_4, window_bounds = array<i64: 1, 1, 1>}]} {
    %c0_i32 = arith.constant 0 : i32
    %0 = arith.cmpi eq, %arg1, %c0_i32 : i32
    %1 = arith.extui %0 : i1 to i32
    %c0_i32_0 = arith.constant 0 : i32
    %2 = arith.cmpi ne, %1, %c0_i32_0 : i32
    scf.if %2 {
      %cst_12 = arith.constant 0.000000e+00 : f32
      %16 = vector.broadcast %cst_12 : f32 to vector<8x1xf32>
      %c0_13 = arith.constant 0 : index
      %c0_14 = arith.constant 0 : index
      %17 = vector.load %arg7[%c0_13, %c0_14] : memref<8x1xf32, #tpu.memory_space<vmem>>, vector<8x1xf32>
      tpu.vector_store %arg7[%c0_13, %c0_14], %16 {strides = array<i32>} : memref<8x1xf32, #tpu.memory_space<vmem>>, vector<8x1xf32>,
    } else {
    }
    %c0 = arith.constant 0 : index
    %c0_1 = arith.constant 0 : index
    %3 = vector.load %arg2[%c0, %c0_1] : memref<8x128xf32, #tpu.memory_space<vmem>>, vector<8x128xf32>
    %c0_2 = arith.constant 0 : index
    %c0_3 = arith.constant 0 : index
    %4 = vector.load %arg5[%c0_2, %c0_3] : memref<128x128xf32, #tpu.memory_space<vmem>>, vector<128x128xf32>
    %cst = arith.constant dense<0.000000e+00> : vector<8x128xf32>
    %5 = tpu.matmul %3, %4, %cst {dimension_numbers = #tpu.dot_dimension_numbers<[1], [0], [0], [1], [0, 0, 1, 1], [], []>} : vector<8x128xf32>, vector<128x128xf32>, vector<8x128xf32> -> vector<8x128xf32>
    %c0_4 = arith.constant 0 : index
    %c0_5 = arith.constant 0 : index
    %6 = vector.load %arg7[%c0_4, %c0_5] : memref<8x1xf32, #tpu.memory_space<vmem>>, vector<8x1xf32>
    %c0_6 = arith.constant 0 : index
    %c0_7 = arith.constant 0 : index
    %7 = vector.load %arg3[%c0_6, %c0_7] : memref<8x128xf32, #tpu.memory_space<vmem>>, vector<8x128xf32>
    %8 = arith.mulf %5, %7 : vector<8x128xf32>
    %cst_8 = arith.constant dense<0.000000e+00> : vector<8xf32>
    %9 = vector.multi_reduction <add>, %8, %cst_8 [1] : vector<8x128xf32> to vector<8xf32>
    %10 = vector.shape_cast %9 : vector<8xf32> to vector<8x1xf32>
    %11 = arith.addf %6, %10 : vector<8x1xf32>
    %c0_9 = arith.constant 0 : index
    %c0_10 = arith.constant 0 : index
    %12 = vector.load %arg7[%c0_9, %c0_10] : memref<8x1xf32, #tpu.memory_space<vmem>>, vector<8x1xf32>
    tpu.vector_store %arg7[%c0_9, %c0_10], %11 {strides = array<i32>} : memref<8x1xf32, #tpu.memory_space<vmem>>, vector<8x1xf32>,
    %c1_i32 = arith.constant 1 : i32
    %13 = arith.cmpi eq, %arg1, %c1_i32 : i32
    %14 = arith.extui %13 : i1 to i32
    %c0_i32_11 = arith.constant 0 : i32
    %15 = arith.cmpi ne, %14, %c0_i32_11 : i32
    scf.if %15 {
      %c0_12 = arith.constant 0 : index
      %c0_13 = arith.constant 0 : index
      %16 = vector.load %arg4[%c0_12, %c0_13] : memref<1x128xf32, #tpu.memory_space<vmem>>, vector<1x128xf32>
      %17 = arith.mulf %3, %3 : vector<8x128xf32>
      %18 = vector.broadcast %16 : vector<1x128xf32> to vector<8x128xf32>
      %19 = arith.mulf %17, %18 : vector<8x128xf32>
      %cst_14 = arith.constant dense<0.000000e+00> : vector<8xf32>
      %20 = vector.multi_reduction <add>, %19, %cst_14 [1] : vector<8x128xf32> to vector<8xf32>
      %21 = vector.shape_cast %20 : vector<8xf32> to vector<8x1xf32>
      %c0_15 = arith.constant 0 : index
      %c0_16 = arith.constant 0 : index
      %22 = vector.load %arg7[%c0_15, %c0_16] : memref<8x1xf32, #tpu.memory_space<vmem>>, vector<8x1xf32>
      %23 = arith.addf %22, %21 : vector<8x1xf32>
      %24 = vector.shape_cast %23 : vector<8x1xf32> to vector<1x8x1xf32>
      %cst_17 = arith.constant dense<0.000000e+00> : vector<1xf32>
      %25 = vector.multi_reduction <add>, %24, %cst_17 [1, 2] : vector<1x8x1xf32> to vector<1xf32>
      %26 = vector.shape_cast %25 : vector<1xf32> to vector<1x1x1xf32>
      %27 = vector.extract %26[0, 0, 0] : f32 from vector<1x1x1xf32>
      %28 = vector.broadcast %27 : f32 to vector<1x1xf32>
      %c0_18 = arith.constant 0 : index
      %c0_19 = arith.constant 0 : index
      %c0_20 = arith.constant 0 : index
      %29 = vector.load %arg6[%c0_18, %c0_19, %c0_20] : memref<1x1x1xf32, #tpu.memory_space<vmem>>, vector<1x1x1xf32>
      %30 = vector.shape_cast %29 : vector<1x1x1xf32> to vector<1x1xf32>
      %31 = vector.shape_cast %28 : vector<1x1xf32> to vector<1x1x1xf32>
      tpu.vector_store %arg6[%c0_18, %c0_19, %c0_20], %31 {strides = array<i32>} : memref<1x1x1xf32, #tpu.memory_space<vmem>>, vector<1x1x1xf32>,
    } else {
    }
    return
  }
  func.func @transform_0(%arg0: i32, %arg1: i32) -> (i32, i32) {
    %c0_i32 = arith.constant 0 : i32
    %c0_i32_0 = arith.constant 0 : i32
    return %c0_i32, %arg0 : i32, i32
  }
  func.func @transform_1(%arg0: i32, %arg1: i32) -> (i32, i32) {
    %c0_i32 = arith.constant 0 : i32
    %c0_i32_0 = arith.constant 0 : i32
    return %c0_i32, %arg1 : i32, i32
  }
  func.func @transform_2(%arg0: i32, %arg1: i32) -> (i32, i32) {
    %c0_i32 = arith.constant 0 : i32
    %c0_i32_0 = arith.constant 0 : i32
    return %c0_i32, %arg0 : i32, i32
  }
  func.func @transform_3(%arg0: i32, %arg1: i32) -> (i32, i32) {
    %c0_i32 = arith.constant 0 : i32
    return %arg0, %arg1 : i32, i32
  }
  func.func @transform_4(%arg0: i32, %arg1: i32) -> (i32, i32, i32) {
    %c0_i32 = arith.constant 0 : i32
    %c0_i32_0 = arith.constant 0 : i32
    %c0_i32_1 = arith.constant 0 : i32
    return %arg0, %c0_i32, %c0_i32_0 : i32, i32, i32
  }
}

</mosaic_0001>

<llo_original>
// kernel: tpu_custom_call.1
$region0: #{tpu_custom_call.1}
  #allocation0 [shape = 'u32[]', space=smem, size = 0x4, offset = 0x4, fixed_abs, tag = 'smem constant byte address 0x4 - core index']
  #allocation1 [shape = 'u32[72,128]{1,0:T(1,128)}', space=vmem, size = 0x9000, scoped, tag = 'internal scratch']
  #allocation2 [shape = 'f32[8,1]{1,0:T(8,128)}', space=vmem, size = 0x1000, scoped, tag = 'scratch operand']
  %s0 = inlined_call_operand.hbm [shape: f32[8,256], index: 0, kind: input, shape index: {}]
  %s1 = inlined_call_operand.hbm [shape: f32[8,256], index: 1, kind: input, shape index: {}]
  %s2 = inlined_call_operand.hbm [shape: f32[1,256], index: 2, kind: input, shape index: {}]
  %s3 = inlined_call_operand.hbm [shape: f32[256,256], index: 3, kind: input, shape index: {}]
  %s4 = inlined_call_operand.vmem [shape: f32[2,1,1], index: 4, kind: output, shape index: {}]
  %s5 = sld [smem:[#allocation0]]
  $region73: #{tpu_custom_call.1} parent=0
    _
  %s7 = ssub.s32 1, %s5
  %s8 = scalar_select 0, %s7, %s5
  $region1: #{tpu_custom_call.1} parent=0
    #allocation3 [shape = 'u8[8192]{0}', space=vmem, size = 0x2000, scoped, tag = 'input window, operand 0']
    #allocation4 [shape = 's32[2]{0}', space=sflag, size = 0x8, scoped, tag = 'scoped memory for tpu_custom_call.1']
    #allocation5 [shape = 'u8[8192]{0}', space=vmem, size = 0x2000, scoped, tag = 'input window, operand 1']
    #allocation6 [shape = 's32[2]{0}', space=sflag, size = 0x8, scoped, tag = 'scoped memory for tpu_custom_call.1']
    #allocation7 [shape = 'u8[1024]{0}', space=vmem, size = 0x400, scoped, tag = 'input window, operand 2']
    #allocation8 [shape = 'u8[131072]{0}', space=vmem, size = 0x20000, scoped, tag = 'input window, operand 3']
    #allocation9 [shape = 's32[2]{0}', space=sflag, size = 0x8, scoped, tag = 'scoped memory for tpu_custom_call.1']
    %9 = vsyncpa [#allocation4], 0
    %s10 = scalar_lea.sflag [#allocation4], 1
    %11 = vsyncpa %s10, 0
    %12 = vsyncpa [#allocation6], 0
    %s13 = scalar_lea.sflag [#allocation6], 1
    %14 = vsyncpa %s13, 0
    %15 = vsyncpa [#allocation9], 0
    %s16 = scalar_lea.sflag [#allocation9], 1
    %17 = vsyncpa %s16, 0
    loop: start=0, step=1, limit=6
    $region2: #{tpu_custom_call.1} parent=1 // loop_pre_header
      _
    $region3: #{tpu_custom_call.1} parent=1 // loop_header
      %s19 = sphi 0, %s23
      %p20 = scmp.ge.s32.totalorder %s19, 6
      %s26 = sphi 0, %s38
      %s27 = sphi 0, %s34
      %s28 = sphi 0, %s26
      %s29 = sphi 0, %s27
      %s30 = sphi 0, %s28
      %s31 = sphi 0, %s29
      %s41 = sphi 0, %s43
      %s44 = sphi 0, %s41
      %s45 = sphi 0, %s44
      %s61 = sphi 0, %s45
      %s67 = sphi 0, %s69
      %s70 = sphi 0, %s67
      %s71 = sphi 0, %s70
      %s87 = sphi 0, %s71
      %s93 = sphi 0, %s95
      %s96 = sphi 0, %s93
      %s97 = sphi 0, %s96
      %s113 = sphi 0, %s97
      %s121 = sphi 0, %s123
      %s124 = sphi 0, %s121
      %s125 = sphi 0, %s124
      %s141 = sphi 0, %s125
      %s147 = sphi 0, %s149
      %s150 = sphi 0, %s147
      %s151 = sphi 0, %s150
      %s167 = sphi 0, %s151
    $region4: #{tpu_custom_call.1} parent=1 // loop_header_branch
      %22 = sbr.rel (%p20) target = $region8
    $region5: #{tpu_custom_call.1} parent=1 // loop_body
      %s24 = ssub.s32 %s19, 1
      %s25 = ssub.s32 %s19, 2
      %s32 = sadd.s32 1, %s27
      %p33 = scmp.ge.s32.totalorder %s32, 2
      %s34 = scalar_select %p33, 0, %s32
      %s35 = sadd.s32 1, %s26
      %s36 = scalar_select %p33, %s35, %s26
      %p37 = scmp.ge.s32.totalorder %s36, 2
      %s38 = scalar_select %p37, 0, %s36
      %s39 = ssub.s32 %s26, %s38
      %p40 = scmp.eq.s32.totalorder %s39, 0
      %s42 = sadd.s32 %s41, 1
      %s43 = scalar_select %p40, %s41, %s42
      %p46 = pneg %p40
      %p47 = scmp.eq.s32.totalorder %s19, 3
      %p48 = por %p46, %p47
      %p49 = scmp.ne.s32.totalorder %s41, %s44
      %p50 = scmp.eq.s32.totalorder %s19, 0
      %p51 = por %p49, %p50
      %p52 = scmp.ne.s32.totalorder %s41, %s44
      %p53 = scmp.eq.s32.totalorder %s24, 3
      %p54 = por %p52, %p53
      %p55 = scmp.ne.s32.totalorder %s44, %s45
      %p56 = scmp.eq.s32.totalorder %s24, 0
      %p57 = por %p55, %p56
      %p58 = scmp.ne.s32.totalorder %s44, %s45
      %p59 = scmp.eq.s32.totalorder %s25, 3
      %p60 = por %p58, %p59
      %p62 = scmp.ne.s32.totalorder %s45, %s61
      %p63 = scmp.eq.s32.totalorder %s25, 0
      %p64 = por %p62, %p63
      %s65 = ssub.s32 %s27, %s34
      %p66 = scmp.eq.s32.totalorder %s65, 0
      %s68 = sadd.s32 %s67, 1
      %s69 = scalar_select %p66, %s67, %s68
      %p72 = pneg %p66
      %p73 = scmp.eq.s32.totalorder %s19, 3
      %p74 = por %p72, %p73
      %p75 = scmp.ne.s32.totalorder %s67, %s70
      %p76 = scmp.eq.s32.totalorder %s19, 0
      %p77 = por %p75, %p76
      %p78 = scmp.ne.s32.totalorder %s67, %s70
      %p79 = scmp.eq.s32.totalorder %s24, 3
      %p80 = por %p78, %p79
      %p81 = scmp.ne.s32.totalorder %s70, %s71
      %p82 = scmp.eq.s32.totalorder %s24, 0
      %p83 = por %p81, %p82
      %p84 = scmp.ne.s32.totalorder %s70, %s71
      %p85 = scmp.eq.s32.totalorder %s25, 3
      %p86 = por %p84, %p85
      %p88 = scmp.ne.s32.totalorder %s71, %s87
      %p89 = scmp.eq.s32.totalorder %s25, 0
      %p90 = por %p88, %p89
      %s91 = ssub.s32 %s26, %s38
      %p92 = scmp.eq.s32.totalorder %s91, 0
      %s94 = sadd.s32 %s93, 1
      %s95 = scalar_select %p92, %s93, %s94
      %p98 = pneg %p92
      %p99 = scmp.eq.s32.totalorder %s19, 3
      %p100 = por %p98, %p99
      %p101 = scmp.ne.s32.totalorder %s93, %s96
      %p102 = scmp.eq.s32.totalorder %s19, 0
      %p103 = por %p101, %p102
      %p104 = scmp.ne.s32.totalorder %s93, %s96
      %p105 = scmp.eq.s32.totalorder %s24, 3
      %p106 = por %p104, %p105
      %p107 = scmp.ne.s32.totalorder %s96, %s97
      %p108 = scmp.eq.s32.totalorder %s24, 0
      %p109 = por %p107, %p108
      %p110 = scmp.ne.s32.totalorder %s96, %s97
      %p111 = scmp.eq.s32.totalorder %s25, 3
      %p112 = por %p110, %p111
      %p114 = scmp.ne.s32.totalorder %s97, %s113
      %p115 = scmp.eq.s32.totalorder %s25, 0
      %p116 = por %p114, %p115
      %s117 = ssub.s32 %s26, %s38
      %s118 = ssub.s32 %s27, %s34
      %s119 = sor.u32 %s117, %s118
      %p120 = scmp.eq.s32.totalorder %s119, 0
      %s122 = sadd.s32 %s121, 1
      %s123 = scalar_select %p120, %s121, %s122
      %p126 = pneg %p120
      %p127 = scmp.eq.s32.totalorder %s19, 3
      %p128 = por %p126, %p127
      %p129 = scmp.ne.s32.totalorder %s121, %s124
      %p130 = scmp.eq.s32.totalorder %s19, 0
      %p131 = por %p129, %p130
      %p132 = scmp.ne.s32.totalorder %s121, %s124
      %p133 = scmp.eq.s32.totalorder %s24, 3
      %p134 = por %p132, %p133
      %p135 = scmp.ne.s32.totalorder %s124, %s125
      %p136 = scmp.eq.s32.totalorder %s24, 0
      %p137 = por %p135, %p136
      %p138 = scmp.ne.s32.totalorder %s124, %s125
      %p139 = scmp.eq.s32.totalorder %s25, 3
      %p140 = por %p138, %p139
      %p142 = scmp.ne.s32.totalorder %s125, %s141
      %p143 = scmp.eq.s32.totalorder %s25, 0
      %p144 = por %p142, %p143
      %s145 = ssub.s32 %s26, %s38
      %p146 = scmp.eq.s32.totalorder %s145, 0
      %s148 = sadd.s32 %s147, 1
      %s149 = scalar_select %p146, %s147, %s148
      %p152 = pneg %p146
      %p153 = scmp.eq.s32.totalorder %s19, 3
      %p154 = por %p152, %p153
      %p155 = scmp.ne.s32.totalorder %s147, %s150
      %p156 = scmp.eq.s32.totalorder %s19, 0
      %p157 = por %p155, %p156
      %p158 = scmp.ne.s32.totalorder %s147, %s150
      %p159 = scmp.eq.s32.totalorder %s24, 3
      %p160 = por %p158, %p159
      %p161 = scmp.ne.s32.totalorder %s150, %s151
      %p162 = scmp.eq.s32.totalorder %s24, 0
      %p163 = por %p161, %p162
      %p164 = scmp.ne.s32.totalorder %s150, %s151
      %p165 = scmp.eq.s32.totalorder %s25, 3
      %p166 = por %p164, %p165
      %p168 = scmp.ne.s32.totalorder %s151, %s167
      %p169 = scmp.eq.s32.totalorder %s25, 0
      %p170 = por %p168, %p169
      %p171 = scmp.le.s32.totalorder 1, %s19
      %p172 = scmp.lt.s32.totalorder %s19, 5
      %p173 = pnand %p171, %p172
      %p174 = pneg %p173
      // Predicated region
      $region9: #{tpu_custom_call.1} parent=5 // pred_check
        _
      $region10: #{tpu_custom_call.1} parent=5 // pred_check_branch
        %176 = sbr.rel (%p173) target = $region12
      $region11: #{tpu_custom_call.1} parent=5 // pred_region
        %s177 = ssub.s32 %s19, 1
      $region12: #{tpu_custom_call.1} parent=5 // pred_fallthru
        _
      %p178 = scmp.lt.s32.totalorder %s19, 4
      // Predicated region
      $region13: #{tpu_custom_call.1} parent=5 // pred_check
        %p179 = pneg %p178
      $region14: #{tpu_custom_call.1} parent=5 // pred_check_branch
        %181 = sbr.rel (%p179) target = $region16
      $region15: #{tpu_custom_call.1} parent=5 // pred_region
        // Predicated region
        $region17: #{tpu_custom_call.1} parent=15 // pred_check
          %p182 = pneg %p51
        $region18: #{tpu_custom_call.1} parent=15 // pred_check_branch
          %184 = sbr.rel (%p182) target = $region20
        $region19: #{tpu_custom_call.1} parent=15 // pred_region
          %s185 = sand.u32 %s41, 1
          %s186 = scalar_lea.sflag [#allocation4], %s185
          %s187 = sand.u32 %s41, 1
          %s188 = smul.addr %s187, 8
          %s189 = scalar_lea.vmem [#allocation3], %s188
          %191 = vsyncadd %s186, 0
          %s192 = smul.addr %s26, 8
          %s193 = scalar_lea.hbm %s0, %s192
          %s195 = sshll.u32 %s193, 4
          %s196 = int_to_ptr.hbm [resolvable:$true] %s195
          %s197 = sshll.u32 %s189, 4
          %s198 = int_to_ptr.vmem [resolvable:$true] %s197
          %200 = dma.hbm_to_vmem [thread:$0]  %s196, 128, %s198, %s186
        $region20: #{tpu_custom_call.1} parent=15 // pred_fallthru
          _
        // Predicated region
        $region21: #{tpu_custom_call.1} parent=15 // pred_check
          %p201 = pneg %p77
        $region22: #{tpu_custom_call.1} parent=15 // pred_check_branch
          %203 = sbr.rel (%p201) target = $region24
        $region23: #{tpu_custom_call.1} parent=15 // pred_region
          %s204 = sand.u32 %s19, 1
          %s205 = scalar_lea.sflag [#allocation6], %s204
          %s206 = sand.u32 %s67, 1
          %s207 = smul.addr %s206, 8
          %s208 = scalar_lea.vmem [#allocation5], %s207
          %210 = vsyncadd %s205, 0
          %s211 = smul.addr %s27, 8
          %s212 = scalar_lea.hbm %s1, %s211
          %s214 = sshll.u32 %s212, 4
          %s215 = int_to_ptr.hbm [resolvable:$true] %s214
          %s216 = sshll.u32 %s208, 4
          %s217 = int_to_ptr.vmem [resolvable:$true] %s216
          %219 = dma.hbm_to_vmem [thread:$0]  %s215, 128, %s217, %s205
        $region24: #{tpu_custom_call.1} parent=15 // pred_fallthru
          _
        // Predicated region
        $region25: #{tpu_custom_call.1} parent=15 // pred_check
          %p220 = pneg %p103
        $region26: #{tpu_custom_call.1} parent=15 // pred_check_branch
          %222 = sbr.rel (%p220) target = $region28
        $region27: #{tpu_custom_call.1} parent=15 // pred_region
          %s223 = sand.u32 %s19, 1
          %s224 = scalar_lea.sflag [#allocation6], %s223
          %s225 = sand.u32 %s93, 1
          %s226 = scalar_lea.vmem [#allocation7], %s225
          %228 = vsyncadd %s224, 0
          %s229 = scalar_lea.hbm %s2, %s26
          %s231 = sshll.u32 %s229, 4
          %s232 = int_to_ptr.hbm [resolvable:$true] %s231
          %s233 = sshll.u32 %s226, 4
          %s234 = int_to_ptr.vmem [resolvable:$true] %s233
          %236 = dma.hbm_to_vmem [thread:$0]  %s232, 16, %s234, %s224
        $region28: #{tpu_custom_call.1} parent=15 // pred_fallthru
          _
        // Predicated region
        $region29: #{tpu_custom_call.1} parent=15 // pred_check
          %p237 = pneg %p131
        $region30: #{tpu_custom_call.1} parent=15 // pred_check_branch
          %239 = sbr.rel (%p237) target = $region32
        $region31: #{tpu_custom_call.1} parent=15 // pred_region
          %s240 = sand.u32 %s121, 1
          %s241 = scalar_lea.sflag [#allocation9], %s240
          %s242 = sand.u32 %s121, 1
          %s243 = smul.addr %s242, 128
          %s244 = scalar_lea.vmem [#allocation8], %s243
          %s245 = smul.u32 16, %s26
          %247 = vsyncadd %s241, 0
          %s248 = smul.addr %s245, 2
          %s249 = sadd.s32 %s27, %s248
          %s250 = smul.addr %s249, 8
          %s251 = scalar_lea.hbm %s3, %s250
          %s252 = sshll.u32 %s251, 4
          %s253 = int_to_ptr.hbm [resolvable:$true] %s252
          %s254 = sshll.u32 %s244, 4
          %s255 = int_to_ptr.vmem [resolvable:$true] %s254
          %260 = dma.hbm_to_vmem [thread:$0]  %s253, 2048, %s255, %s241, 256, 128, 8
        $region32: #{tpu_custom_call.1} parent=15 // pred_fallthru
          _
      $region16: #{tpu_custom_call.1} parent=5 // pred_fallthru
        _
      %p261 = scmp.le.s32.totalorder 1, %s19
      %p262 = scmp.lt.s32.totalorder %s19, 5
      %p263 = pnand %p261, %p262
      %p264 = pneg %p263
      // Predicated region
      $region33: #{tpu_custom_call.1} parent=5 // pred_check
        _
      $region34: #{tpu_custom_call.1} parent=5 // pred_check_branch
        %266 = sbr.rel (%p263) target = $region36
      $region35: #{tpu_custom_call.1} parent=5 // pred_region
        %s267 = ssub.s32 %s19, 1
        %s268 = sand.u32 %s44, 1
        %s269 = scalar_lea.sflag [#allocation4], %s268
        %s270 = sand.u32 %s44, 1
        %s271 = smul.addr %s270, 8
        %s272 = scalar_lea.vmem [#allocation3], %s271
        // Predicated region
        $region37: #{tpu_custom_call.1} parent=35 // pred_check
          %p273 = pneg %p57
        $region38: #{tpu_custom_call.1} parent=35 // pred_check_branch
          %275 = sbr.rel (%p273) target = $region40
        $region39: #{tpu_custom_call.1} parent=35 // pred_region
          %277 = dma.done %s269, 128
        $region40: #{tpu_custom_call.1} parent=35 // pred_fallthru
          _
        %s278 = sand.u32 %s24, 1
        %s279 = scalar_lea.sflag [#allocation6], %s278
        %s280 = sand.u32 %s70, 1
        %s281 = smul.addr %s280, 8
        %s282 = scalar_lea.vmem [#allocation5], %s281
        // Predicated region
        $region41: #{tpu_custom_call.1} parent=35 // pred_check
          %p283 = pneg %p83
        $region42: #{tpu_custom_call.1} parent=35 // pred_check_branch
          %285 = sbr.rel (%p283) target = $region44
        $region43: #{tpu_custom_call.1} parent=35 // pred_region
          %287 = dma.done %s279, 128
        $region44: #{tpu_custom_call.1} parent=35 // pred_fallthru
          _
        %s288 = sand.u32 %s24, 1
        %s289 = scalar_lea.sflag [#allocation6], %s288
        %s290 = sand.u32 %s96, 1
        %s291 = scalar_lea.vmem [#allocation7], %s290
        // Predicated region
        $region45: #{tpu_custom_call.1} parent=35 // pred_check
          %p292 = pneg %p109
        $region46: #{tpu_custom_call.1} parent=35 // pred_check_branch
          %294 = sbr.rel (%p292) target = $region48
        $region47: #{tpu_custom_call.1} parent=35 // pred_region
          %296 = dma.done %s289, 16
        $region48: #{tpu_custom_call.1} parent=35 // pred_fallthru
          _
        %s297 = sand.u32 %s124, 1
        %s298 = scalar_lea.sflag [#allocation9], %s297
        %s299 = sand.u32 %s124, 1
        %s300 = smul.addr %s299, 128
        %s301 = scalar_lea.vmem [#allocation8], %s300
        // Predicated region
        $region49: #{tpu_custom_call.1} parent=35 // pred_check
          %p302 = pneg %p137
        $region50: #{tpu_custom_call.1} parent=35 // pred_check_branch
          %304 = sbr.rel (%p302) target = $region52
        $region51: #{tpu_custom_call.1} parent=35 // pred_region
          %306 = dma.done %s298, 2048
        $region52: #{tpu_custom_call.1} parent=35 // pred_fallthru
          _
        %s307 = sand.u32 %s44, 1
        %s308 = scalar_lea.sflag [#allocation4], %s307
        %s309 = sand.u32 %s44, 1
        %s310 = smul.addr %s309, 8
        %s311 = scalar_lea.vmem [#allocation3], %s310
        %p312 = pneg %p57
        %p313 = pneg %p54
        %s314 = sand.u32 %s24, 1
        %s315 = scalar_lea.sflag [#allocation6], %s314
        %s316 = sand.u32 %s70, 1
        %s317 = smul.addr %s316, 8
        %s318 = scalar_lea.vmem [#allocation5], %s317
        %p319 = pneg %p83
        %p320 = pneg %p80
        %s321 = sand.u32 %s24, 1
        %s322 = scalar_lea.sflag [#allocation6], %s321
        %s323 = sand.u32 %s96, 1
        %s324 = scalar_lea.vmem [#allocation7], %s323
        %p325 = pneg %p109
        %p326 = pneg %p106
        %s327 = sand.u32 %s124, 1
        %s328 = scalar_lea.sflag [#allocation9], %s327
        %s329 = sand.u32 %s124, 1
        %s330 = smul.addr %s329, 128
        %s331 = scalar_lea.vmem [#allocation8], %s330
        %p332 = pneg %p137
        %p333 = pneg %p134
        %p334 = pneg %p163
        %p335 = pneg %p160
        %p336 = scmp.lt.s32.totalorder %s28, 1
        %s337 = scalar_select %p336, %s28, 1
        %s338 = scalar_lea.vmem %s4, %s337
        %s339 = smul.u32 16, %s28
        %p340 = scmp.lt.s32.totalorder %s28, 1
        %s341 = scalar_select %p340, %s28, 1
        %s342 = scalar_lea.vmem %s4, %s341
        %p343 = scmp.eq.s32.totalorder %s29, 0
        // Predicated region
        $region53: #{tpu_custom_call.1} parent=35 // pred_check
          %p344 = pneg %p343
        $region54: #{tpu_custom_call.1} parent=35 // pred_check_branch
          %346 = sbr.rel (%p344) target = $region56
        $region55: #{tpu_custom_call.1} parent=35 // pred_region
          %vm347 = vcmask 7168
          %348 = vst.msk [vmem:[#allocation2] sm:$0xff] %vm347, 0.0
        $region56: #{tpu_custom_call.1} parent=35 // pred_fallthru
          _
        %v349 = vld [vmem:[%s272] sm:$0xff]
        %v350 = vld [vmem:[%s301] sm:$0xff]
        %v351 = vld [vmem:[%s301 + $0x8] sm:$0xff]
        %v352 = vld [vmem:[%s301 + $0x10] sm:$0xff]
        %v353 = vld [vmem:[%s301 + $0x18] sm:$0xff]
        %v354 = vld [vmem:[%s301 + $0x20] sm:$0xff]
        %v355 = vld [vmem:[%s301 + $0x28] sm:$0xff]
        %v356 = vld [vmem:[%s301 + $0x30] sm:$0xff]
        %v357 = vld [vmem:[%s301 + $0x38] sm:$0xff]
        %v358 = vld [vmem:[%s301 + $0x40] sm:$0xff]
        %v359 = vld [vmem:[%s301 + $0x48] sm:$0xff]
        %v360 = vld [vmem:[%s301 + $0x50] sm:$0xff]
        %v361 = vld [vmem:[%s301 + $0x58] sm:$0xff]
        %v362 = vld [vmem:[%s301 + $0x60] sm:$0xff]
        %v363 = vld [vmem:[%s301 + $0x68] sm:$0xff]
        %v364 = vld [vmem:[%s301 + $0x70] sm:$0xff]
        %v365 = vld [vmem:[%s301 + $0x78] sm:$0xff]
        %366 = vmatpush.msra.mxu0 %v365
        %367 = vmatpush.msra.mxu0 %v364
        %368 = vmatpush.msra.mxu0 %v363
        %369 = vmatpush.msra.mxu0 %v362
        %370 = vmatpush.msra.mxu0 %v361
        %371 = vmatpush.msra.mxu0 %v360
        %372 = vmatpush.msra.mxu0 %v359
        %373 = vmatpush.msra.mxu0 %v358
        %374 = vmatpush.msra.mxu0 %v357
        %375 = vmatpush.msra.mxu0 %v356
        %376 = vmatpush.msra.mxu0 %v355
        %377 = vmatpush.msra.mxu0 %v354
        %378 = vmatpush.msra.mxu0 %v353
        %379 = vmatpush.msra.mxu0 %v352
        %380 = vmatpush.msra.mxu0 %v351
        %381 = vmatpush.msra.mxu0 %v350
        %382 = vmatmul.f32.gmra.mxu0 %v349
        %v383 = vpop.f32.mrf.mxu0
        %v384 = vadd.f32 0.0, %v383
        %385 = vdwg.mxu0
        %v386 = vld [vmem:[#allocation2] sm:$0xff]
        %v387 = vld [vmem:[%s282] sm:$0xff]
        %v388 = vmul.f32 %v384, %v387
        %389 = vadd.xlane.f32.xlu0 %v388
        %v390 = vpop.xlane.xlu0 %389
        %v391 = vadd.f32 %v386, %v390
        %vm392 = vcmask 7168
        %393 = vst.msk [vmem:[#allocation2] sm:$0xff] %vm392, %v391
        %p394 = scmp.eq.s32.totalorder %s29, 1
        // Predicated region
        $region57: #{tpu_custom_call.1} parent=35 // pred_check
          %p395 = pneg %p394
        $region58: #{tpu_custom_call.1} parent=35 // pred_check_branch
          %397 = sbr.rel (%p395) target = $region60
        $region59: #{tpu_custom_call.1} parent=35 // pred_region
          %v398 = vld [vmem:[%s291] sm:$0x1]
          %v399 = vmul.f32 %v349, %v349
          %v401 = vperm.slane %v398, 0
          %v403 = vmul.f32 %v399, %v401
          %404 = vadd.xlane.f32.xlu0 %v403
          %v405 = vpop.xlane.xlu0 %404
          %v406 = vld [vmem:[#allocation2] sm:$0xff]
          %v407 = vadd.f32 %v406, %v405
          %v408 = vsel %vm392, %v407, 0.0
          %409 = vadd.xlane.f32.xlu0 %v408
          %v410 = vpop.xlane.xlu0 %409
          %v411 = vrot.slane %v410, 4
          %v412 = vadd.f32 %v410, %v411
          %v413 = vrot.slane %v412, 2
          %v414 = vadd.f32 %v412, %v413
          %v415 = vrot.slane %v414, 1
          %v416 = vadd.f32 %v414, %v415
          %s417 = vtos %v416
          %v418 = vstv %s417
          %vm419 = vcmask 0
          %420 = vst.msk [vmem:[%s342] sm:$0x1] %vm419, %v418
        $region60: #{tpu_custom_call.1} parent=35 // pred_fallthru
          _
        %p421 = scmp.lt.s32.totalorder %s28, 1
        %s422 = scalar_select %p421, %s28, 1
        %s423 = scalar_lea.vmem %s4, %s422
        // Predicated region
        $region61: #{tpu_custom_call.1} parent=35 // pred_check
          %p424 = pneg %p160
        $region62: #{tpu_custom_call.1} parent=35 // pred_check_branch
          %426 = sbr.rel (%p424) target = $region64
        $region63: #{tpu_custom_call.1} parent=35 // pred_region
          _
        $region64: #{tpu_custom_call.1} parent=35 // pred_fallthru
          _
      $region36: #{tpu_custom_call.1} parent=5 // pred_fallthru
        _
      %p427 = scmp.le.s32.totalorder 2, %s19
      // Predicated region
      $region65: #{tpu_custom_call.1} parent=5 // pred_check
        %p428 = pneg %p427
      $region66: #{tpu_custom_call.1} parent=5 // pred_check_branch
        %430 = sbr.rel (%p428) target = $region68
      $region67: #{tpu_custom_call.1} parent=5 // pred_region
        %s431 = ssub.s32 %s19, 2
        // Predicated region
        $region69: #{tpu_custom_call.1} parent=67 // pred_check
          %p432 = pneg %p166
        $region70: #{tpu_custom_call.1} parent=67 // pred_check_branch
          %434 = sbr.rel (%p432) target = $region72
        $region71: #{tpu_custom_call.1} parent=67 // pred_region
          %p435 = scmp.lt.s32.totalorder %s30, 1
          %s436 = scalar_select %p435, %s30, 1
          %s437 = scalar_lea.vmem %s4, %s436
        $region72: #{tpu_custom_call.1} parent=67 // pred_fallthru
          _
      $region68: #{tpu_custom_call.1} parent=5 // pred_fallthru
        _
    $region6: #{tpu_custom_call.1} parent=1 // loop_footer
      %s23 = sadd.s32 1, %s19
    $region7: #{tpu_custom_call.1} parent=1 // loop_footer_branch
      %18 = sbr.rel target = $region3
    $region8: #{tpu_custom_call.1} parent=1 // loop_exit
      _
    %438 = vsyncpa [#allocation4], 1
    %s439 = scalar_lea.sflag [#allocation4], 1
    %440 = vsyncpa %s439, 1
    %441 = vsyncpa [#allocation6], 1
    %s442 = scalar_lea.sflag [#allocation6], 1
    %443 = vsyncpa %s442, 1
    %444 = vsyncpa [#allocation9], 1
    %s445 = scalar_lea.sflag [#allocation9], 1
    %446 = vsyncpa %s445, 1

</llo_original>
